<compile_context>
chip_gen: v6e
topology: v6e:2x2x1
jax: 0.10.0
libtpu: 0.0.40
codegen_flags: <defaults>
</compile_context>

<pallas_src>
import functools

import jax
import jax.numpy as jnp
from jax import lax
from jax.experimental import pallas as pl
from jax.experimental.pallas import tpu as pltpu

EPS = 1e-8

# VMEM budgeting — conservative across v5e / v6e / v7x (v7x: 64 MiB physical
# per TensorCore, so keep the scoped request well under that).
_VMEM_LIMIT = 48 << 20      # scoped-VMEM limit requested from Mosaic
_FUSED_BUDGET = 40 << 20    # max estimated working set for the fused path
_TILE_CAP = 4 << 20         # max storage bytes per (1, tn, tk) tile (two-pass)


# --------------------------------------------------------------------------
# Fused single-pass path (per-batch slab resident in VMEM).
# --------------------------------------------------------------------------
def _gln_fused_kernel(y_ref, gamma_ref, beta_ref, o_ref, *, count):
    yt = y_ref[...].astype(jnp.float32)                      # (1, N, K)
    mean = jnp.sum(yt) / count
    d = yt - mean                                            # exact two-pass var
    var = jnp.sum(d * d) / count
    inv_std = lax.rsqrt(var + EPS)
    scale = gamma_ref[...].astype(jnp.float32) * inv_std     # (1, N, 1)
    o_ref[...] = (d * scale + beta_ref[...].astype(jnp.float32)).astype(o_ref.dtype)


def _gln_fused(y, gamma, beta):
    M, N, K = y.shape
    itemsize = jnp.dtype(y.dtype).itemsize
    cost = pl.CostEstimate(flops=7 * M * N * K, transcendentals=M,
                           bytes_accessed=2 * M * N * K * itemsize)
    return pl.pallas_call(
        functools.partial(_gln_fused_kernel, count=float(N * K)),
        out_shape=jax.ShapeDtypeStruct((M, N, K), y.dtype),
        grid_spec=pltpu.PrefetchScalarGridSpec(
            num_scalar_prefetch=0,
            grid=(M,),
            in_specs=[pl.BlockSpec((1, N, K), lambda m: (m, 0, 0)),
                      pl.BlockSpec((1, N, 1), lambda m: (0, 0, 0)),
                      pl.BlockSpec((1, N, 1), lambda m: (0, 0, 0))],
            out_specs=pl.BlockSpec((1, N, K), lambda m: (m, 0, 0))),
        compiler_params=pltpu.CompilerParams(
            dimension_semantics=("parallel",),
            vmem_limit_bytes=_VMEM_LIMIT),
        cost_estimate=cost,
    )(y, gamma, beta)


# --------------------------------------------------------------------------
# Two-pass fallback for slabs too large for VMEM.
# --------------------------------------------------------------------------
def _pick_tile(N, K, itemsize, cap_bytes):
    """Tiling of the (N, K) per-batch slab: exactly one of N / K is tiled.

    Returns (tn, tk).  tk is a multiple of 128 (or the full K); tn is a
    multiple of 8 (or the full N), so blocks always satisfy the (8, 128) rule
    (full-extent dims are always legal)."""
    if N * K * itemsize <= cap_bytes:
        return N, K
    if K % 128 == 0:
        best = 128
        for tk in range(128, K + 1, 128):
            if K % tk == 0 and N * tk * itemsize <= cap_bytes:
                best = tk
        # TODO(synk): if even tk=128 overflows the cap (very large N), the
        # channel axis should be tiled as well; the raised vmem limit keeps
        # moderate overshoots compiling.
        return N, best
    # K not a multiple of 128: tile the channel axis instead (full-K lanes).
    cands = [tn for tn in range(8, N + 1, 8) if N % tn == 0]
    fits = [tn for tn in cands if tn * K * itemsize <= cap_bytes]
    if fits:
        return max(fits), K
    if cands:
        return min(cands), K
    # TODO(synk): irregular K with N not a multiple of 8 and an oversized slab
    # falls back to one full-slab block per grid step (may need more VMEM).
    return N, K


def _gln_stats_kernel(y_ref, mean_ref, istd_ref, acc_sum, acc_sq, *, count):
    t = pl.program_id(1)

    @pl.when(t == 0)
    def _():
        acc_sum[...] = jnp.zeros_like(acc_sum)
        acc_sq[...] = jnp.zeros_like(acc_sq)

    # Elementwise (pure-VPU) tile accumulation; the cross-lane/sublane reduce
    # runs once per batch element under pl.when(last), keeping the XLU and any
    # scalar dependency chain off the per-step path and improving accuracy.
    yt = y_ref[...].astype(jnp.float32)
    acc_sum[...] += yt
    acc_sq[...] += yt * yt

    @pl.when(t == pl.num_programs(1) - 1)
    def _():
        s = jnp.sum(acc_sum[...])
        sq = jnp.sum(acc_sq[...])
        mean = s / count
        # E[y^2] - mean^2 (clamped).  TODO(synk): a shifted/Welford combine
        # would be more robust for inputs with |mean| >> std.
        var = jnp.maximum(sq / count - mean * mean, 0.0)
        mean_ref[...] = jnp.zeros_like(mean_ref) + mean
        istd_ref[...] = jnp.zeros_like(istd_ref) + lax.rsqrt(var + EPS)


def _gln_apply_kernel(y_ref, mean_ref, istd_ref, gamma_ref, beta_ref, o_ref):
    # out = (y - mean) * (gamma * inv_std) + beta, folded into one FMA/elem.
    scale = gamma_ref[...].astype(jnp.float32) * istd_ref[...]        # (1, tn, 1)
    shift = beta_ref[...].astype(jnp.float32) - mean_ref[...] * scale
    o_ref[...] = (y_ref[...].astype(jnp.float32) * scale + shift).astype(o_ref.dtype)


def _gln_two_pass(y, gamma, beta, tile_cap_bytes):
    M, N, K = y.shape
    itemsize = jnp.dtype(y.dtype).itemsize
    tn, tk = _pick_tile(N, K, itemsize, tile_cap_bytes)
    nn, nk = N // tn, K // tk
    ntiles = nn * nk                 # exactly one of nn / nk exceeds 1 (or both 1)

    if nk > 1:                       # length-tiled (lane-dense K tiles)
        def y_map(m, t): return (m, 0, t)
        def gb_map(m, t): return (0, 0, 0)
    else:                            # channel-tiled (or a single full-slab tile)
        def y_map(m, t): return (m, t, 0)
        def gb_map(m, t): return (0, t, 0)

    # ---- Pass 1: per-batch mean / inv_std ----
    stats_cost = pl.CostEstimate(flops=3 * M * N * K, transcendentals=M,
                                 bytes_accessed=M * N * K * itemsize)
    mean, inv_std = pl.pallas_call(
        functools.partial(_gln_stats_kernel, count=float(N * K)),
        out_shape=(jax.ShapeDtypeStruct((M, 1, 1), jnp.float32),
                   jax.ShapeDtypeStruct((M, 1, 1), jnp.float32)),
        grid_spec=pltpu.PrefetchScalarGridSpec(
            num_scalar_prefetch=0,
            grid=(M, ntiles),
            in_specs=[pl.BlockSpec((1, tn, tk), y_map)],
            out_specs=(pl.BlockSpec((1, 1, 1), lambda m, t: (m, 0, 0)),
                       pl.BlockSpec((1, 1, 1), lambda m, t: (m, 0, 0))),
            scratch_shapes=[pltpu.VMEM((1, tn, tk), jnp.float32),
                            pltpu.VMEM((1, tn, tk), jnp.float32)]),
        compiler_params=pltpu.CompilerParams(
            dimension_semantics=("parallel", "arbitrary"),
            vmem_limit_bytes=_VMEM_LIMIT),
        cost_estimate=stats_cost,
    )(y)

    # ---- Pass 2: lane-dense FMA apply (scale/shift computed in-kernel) ----
    apply_cost = pl.CostEstimate(flops=2 * M * N * K, transcendentals=0,
                                 bytes_accessed=2 * M * N * K * itemsize)
    return pl.pallas_call(
        _gln_apply_kernel,
        out_shape=jax.ShapeDtypeStruct((M, N, K), y.dtype),
        grid_spec=pltpu.PrefetchScalarGridSpec(
            num_scalar_prefetch=0,
            grid=(M, ntiles),
            in_specs=[pl.BlockSpec((1, tn, tk), y_map),
                      pl.BlockSpec((1, 1, 1), lambda m, t: (m, 0, 0)),
                      pl.BlockSpec((1, 1, 1), lambda m, t: (m, 0, 0)),
                      pl.BlockSpec((1, tn, 1), gb_map),
                      pl.BlockSpec((1, tn, 1), gb_map)],
            out_specs=pl.BlockSpec((1, tn, tk), y_map)),
        compiler_params=pltpu.CompilerParams(
            dimension_semantics=("parallel", "parallel"),
            vmem_limit_bytes=_VMEM_LIMIT),
        cost_estimate=apply_cost,
    )(y, mean, inv_std, gamma, beta)


# --------------------------------------------------------------------------
# Public entry point.
# --------------------------------------------------------------------------
def global_layer_norm(y, gamma, beta, *, force_two_pass=False,
                      tile_cap_bytes=_TILE_CAP):
    """y: [M, N, K]; gamma, beta: [1, N, 1]. Returns gLN(y): [M, N, K]."""
    M, N, K = y.shape
    itemsize = jnp.dtype(y.dtype).itemsize
    slab = N * K * itemsize
    # Fused-path working set: 2x double-buffered input + 2x output slabs in the
    # storage dtype, plus ~2 slab-sized f32 in-kernel temporaries.
    fused_ws = 4 * slab + 2 * N * K * 4
    if not force_two_pass and fused_ws <= _FUSED_BUDGET:
        return _gln_fused(y, gamma, beta)
    return _gln_two_pass(y, gamma, beta, tile_cap_bytes)


def _reference(y, gamma, beta):
    mean = jnp.mean(y, axis=(1, 2), keepdims=True)
    var = jnp.mean((y - mean) ** 2, axis=(1, 2), keepdims=True)
    return gamma * (y - mean) / jnp.sqrt(var + EPS) + beta


if __name__ == "__main__":
    key = jax.random.PRNGKey(0)
    k0, k1, k2 = jax.random.split(key, 3)

    def check(out, ref, tol, name):
        assert jnp.allclose(out, ref, atol=tol, rtol=tol), f"mismatch vs reference ({name})"

    # 1) Small shape matching the module's forward (batch=2, channels=4, length=16)
    #    — fused single-pass path.
    M, N, K = 2, 4, 16
    y = jax.random.normal(k0, (M, N, K), dtype=jnp.float32)
    gamma = jnp.ones((1, N, 1), jnp.float32)   # reset_parameters(): fill_(1)
    beta = jnp.zeros((1, N, 1), jnp.float32)   # reset_parameters(): zero_()
    out = jax.block_until_ready(global_layer_norm(y, gamma, beta))
    check(out, _reference(y, gamma, beta), 1e-5, "fused small")

    # 2) Larger (still small) shape, also on the fused path.
    M2, N2, K2 = 2, 8, 4096
    y2 = jax.random.normal(k1, (M2, N2, K2), dtype=jnp.float32)
    gamma2 = jnp.ones((1, N2, 1), jnp.float32)
    beta2 = jnp.zeros((1, N2, 1), jnp.float32)
    out2 = jax.block_until_ready(global_layer_norm(y2, gamma2, beta2))
    check(out2, _reference(y2, gamma2, beta2), 1e-4, "fused large")

    # 3) Same shape forced down the two-pass, length-tiled fallback
    #    (small tile cap so K is split into multiple lane-dense tiles).
    out3 = jax.block_until_ready(
        global_layer_norm(y2, gamma2, beta2, force_two_pass=True,
                          tile_cap_bytes=64 << 10))
    check(out3, _reference(y2, gamma2, beta2), 1e-4, "two-pass K-tiled")

    # 4) Irregular length (K % 128 != 0) forced down the channel-tiled fallback.
    M4, N4, K4 = 2, 16, 528
    y4 = jax.random.normal(k2, (M4, N4, K4), dtype=jnp.float32)
    gamma4 = jnp.ones((1, N4, 1), jnp.float32)
    beta4 = jnp.zeros((1, N4, 1), jnp.float32)
    out4 = jax.block_until_ready(
        global_layer_norm(y4, gamma4, beta4, force_two_pass=True,
                          tile_cap_bytes=32 << 10))
    check(out4, _reference(y4, gamma4, beta4), 1e-4, "two-pass N-tiled")

    print("KERNEL_OK")
</pallas_src>

<mosaic_0001>
module attributes {stable_mosaic.version = 11 : i64} {
  func.func @_gln_fused_kernel(%arg0: i32, %arg1: memref<1x4x16xf32, #tpu.memory_space<vmem>>, %arg2: memref<1x4x1xf32, #tpu.memory_space<vmem>>, %arg3: memref<1x4x1xf32, #tpu.memory_space<vmem>>, %arg4: memref<1x4x16xf32, #tpu.memory_space<vmem>>) attributes {dimension_semantics = [#tpu.dimension_semantics<parallel>], iteration_bounds = array<i64: 2>, scalar_prefetch = 0 : i64, scratch_operands = 0 : i64, tpu.core_type = #tpu.core_type<tc>, window_params = [{transform_indices = @transform_0, window_bounds = array<i64: 1, 4, 16>}, {pipeline_mode = #tpu.pipeline_mode<synchronous>, transform_indices = @transform_1, window_bounds = array<i64: 1, 4, 1>}, {pipeline_mode = #tpu.pipeline_mode<synchronous>, transform_indices = @transform_2, window_bounds = array<i64: 1, 4, 1>}, {transform_indices = @transform_3, window_bounds = array<i64: 1, 4, 16>}]} {
    %c0 = arith.constant 0 : index
    %c0_0 = arith.constant 0 : index
    %c0_1 = arith.constant 0 : index
    %0 = vector.load %arg1[%c0, %c0_0, %c0_1] : memref<1x4x16xf32, #tpu.memory_space<vmem>>, vector<1x4x16xf32>
    %1 = vector.shape_cast %0 : vector<1x4x16xf32> to vector<1x1x4x16xf32>
    %cst = arith.constant dense<0.000000e+00> : vector<1xf32>
    %2 = vector.multi_reduction <add>, %1, %cst [1, 2, 3] : vector<1x1x4x16xf32> to vector<1xf32>
    %3 = vector.shape_cast %2 : vector<1xf32> to vector<1x1x1x1xf32>
    %4 = vector.extract %3[0, 0, 0, 0] : f32 from vector<1x1x1x1xf32>
    %cst_2 = arith.constant 6.400000e+01 : f32
    %5 = arith.divf %4, %cst_2 : f32
    %6 = vector.broadcast %5 : f32 to vector<1x4x16xf32>
    %7 = arith.subf %0, %6 : vector<1x4x16xf32>
    %8 = arith.mulf %7, %7 : vector<1x4x16xf32>
    %9 = vector.shape_cast %8 : vector<1x4x16xf32> to vector<1x1x4x16xf32>
    %cst_3 = arith.constant dense<0.000000e+00> : vector<1xf32>
    %10 = vector.multi_reduction <add>, %9, %cst_3 [1, 2, 3] : vector<1x1x4x16xf32> to vector<1xf32>
    %11 = vector.shape_cast %10 : vector<1xf32> to vector<1x1x1x1xf32>
    %12 = vector.extract %11[0, 0, 0, 0] : f32 from vector<1x1x1x1xf32>
    %cst_4 = arith.constant 6.400000e+01 : f32
    %13 = arith.divf %12, %cst_4 : f32
    %cst_5 = arith.constant 9.99999993E-9 : f32
    %14 = arith.addf %13, %cst_5 : f32
    %15 = math.rsqrt %14 : f32
    %c0_6 = arith.constant 0 : index
    %c0_7 = arith.constant 0 : index
    %c0_8 = arith.constant 0 : index
    %16 = vector.load %arg2[%c0_6, %c0_7, %c0_8] : memref<1x4x1xf32, #tpu.memory_space<vmem>>, vector<1x4x1xf32>
    %17 = vector.broadcast %15 : f32 to vector<1x4x1xf32>
    %18 = arith.mulf %16, %17 : vector<1x4x1xf32>
    %19 = vector.broadcast %18 : vector<1x4x1xf32> to vector<1x4x16xf32>
    %20 = arith.mulf %7, %19 : vector<1x4x16xf32>
    %c0_9 = arith.constant 0 : index
    %c0_10 = arith.constant 0 : index
    %c0_11 = arith.constant 0 : index
    %21 = vector.load %arg3[%c0_9, %c0_10, %c0_11] : memref<1x4x1xf32, #tpu.memory_space<vmem>>, vector<1x4x1xf32>
    %22 = vector.broadcast %21 : vector<1x4x1xf32> to vector<1x4x16xf32>
    %23 = arith.addf %20, %22 : vector<1x4x16xf32>
    %c0_12 = arith.constant 0 : index
    %c0_13 = arith.constant 0 : index
    %c0_14 = arith.constant 0 : index
    %24 = vector.load %arg4[%c0_12, %c0_13, %c0_14] : memref<1x4x16xf32, #tpu.memory_space<vmem>>, vector<1x4x16xf32>
    tpu.vector_store %arg4[%c0_12, %c0_13, %c0_14], %23 {strides = array<i32>} : memref<1x4x16xf32, #tpu.memory_space<vmem>>, vector<1x4x16xf32>,
    return
  }
  func.func @transform_0(%arg0: i32) -> (i32, i32, i32) {
    %c0_i32 = arith.constant 0 : i32
    %c0_i32_0 = arith.constant 0 : i32
    %c0_i32_1 = arith.constant 0 : i32
    return %arg0, %c0_i32, %c0_i32_0 : i32, i32, i32
  }
  func.func @transform_1(%arg0: i32) -> (i32, i32, i32) {
    %c0_i32 = arith.constant 0 : i32
    %c0_i32_0 = arith.constant 0 : i32
    %c0_i32_1 = arith.constant 0 : i32
    %c0_i32_2 = arith.constant 0 : i32
    return %c0_i32, %c0_i32_0, %c0_i32_1 : i32, i32, i32
  }
  func.func @transform_2(%arg0: i32) -> (i32, i32, i32) {
    %c0_i32 = arith.constant 0 : i32
    %c0_i32_0 = arith.constant 0 : i32
    %c0_i32_1 = arith.constant 0 : i32
    %c0_i32_2 = arith.constant 0 : i32
    return %c0_i32, %c0_i32_0, %c0_i32_1 : i32, i32, i32
  }
  func.func @transform_3(%arg0: i32) -> (i32, i32, i32) {
    %c0_i32 = arith.constant 0 : i32
    %c0_i32_0 = arith.constant 0 : i32
    %c0_i32_1 = arith.constant 0 : i32
    return %arg0, %c0_i32, %c0_i32_0 : i32, i32, i32
  }
}

</mosaic_0001>

<llo_original>
// kernel: tpu_custom_call.1
$region0: #{tpu_custom_call.1}
  #allocation0 [shape = 'u32[]', space=smem, size = 0x4, offset = 0x4, fixed_abs, tag = 'smem constant byte address 0x4 - core index']
  #allocation1 [shape = 'u32[144,128]{1,0:T(1,128)}', space=vmem, size = 0x12000, scoped, tag = 'internal scratch']
  %s0 = inlined_call_operand.vmem [shape: f32[2,4,16], index: 0, kind: input, shape index: {}]
  %s1 = inlined_call_operand.vmem [shape: f32[1,4,1], index: 1, kind: input, shape index: {}]
  %s2 = inlined_call_operand.vmem [shape: f32[1,4,1], index: 2, kind: input, shape index: {}]
  %s3 = inlined_call_operand.hbm [shape: f32[2,4,16], index: 3, kind: output, shape index: {}]
  %s4 = sld [smem:[#allocation0]]
  $region45: #{tpu_custom_call.1} parent=0
    _
  %s6 = ssub.s32 1, %s4
  %s7 = scalar_select 0, %s6, %s4
  $region1: #{tpu_custom_call.1} parent=0
    #allocation2 [shape = 'u8[4096]{0}', space=vmem, size = 0x1000, scoped, tag = 'output window, operand 0']
    #allocation3 [shape = 's32[2]{0}', space=sflag, size = 0x8, scoped, tag = 'scoped memory for tpu_custom_call.1']
    %8 = vsyncpa [#allocation3], 0
    %s9 = scalar_lea.sflag [#allocation3], 1
    %10 = vsyncpa %s9, 0
    loop: start=0, step=1, limit=4
    $region2: #{tpu_custom_call.1} parent=1 // loop_pre_header
      _
    $region3: #{tpu_custom_call.1} parent=1 // loop_header
      %s12 = sphi 0, %s16
      %p13 = scmp.ge.s32.totalorder %s12, 4
      %s22 = sphi 0, %s24
      %s25 = sphi 0, %s22
      %s26 = sphi 0, %s25
      %s42 = sphi 0, %s26
      %s46 = sphi 0, %s46
      %s48 = sphi 0, %s46
      %s49 = sphi 0, %s48
      %s63 = sphi 0, %s49
      %s67 = sphi 0, %s67
      %s69 = sphi 0, %s67
      %s70 = sphi 0, %s69
      %s84 = sphi 0, %s70
      %s90 = sphi 0, %s92
      %s93 = sphi 0, %s90
      %s94 = sphi 0, %s93
      %s110 = sphi 0, %s94
    $region4: #{tpu_custom_call.1} parent=1 // loop_header_branch
      %15 = sbr.rel (%p13) target = $region8
    $region5: #{tpu_custom_call.1} parent=1 // loop_body
      %s17 = ssub.s32 %s12, 1
      %s18 = ssub.s32 %s12, 2
      %s19 = sadd.s32 %s12, 1
      %s20 = ssub.s32 %s12, %s19
      %p21 = scmp.eq.s32.totalorder %s20, 0
      %s23 = sadd.s32 %s22, 1
      %s24 = scalar_select %p21, %s22, %s23
      %p27 = pneg %p21
      %p28 = scmp.eq.s32.totalorder %s12, 1
      %p29 = por %p27, %p28
      %p30 = scmp.ne.s32.totalorder %s22, %s25
      %p31 = scmp.eq.s32.totalorder %s12, 0
      %p32 = por %p30, %p31
      %p33 = scmp.ne.s32.totalorder %s22, %s25
      %p34 = scmp.eq.s32.totalorder %s17, 1
      %p35 = por %p33, %p34
      %p36 = scmp.ne.s32.totalorder %s25, %s26
      %p37 = scmp.eq.s32.totalorder %s17, 0
      %p38 = por %p36, %p37
      %p39 = scmp.ne.s32.totalorder %s25, %s26
      %p40 = scmp.eq.s32.totalorder %s18, 1
      %p41 = por %p39, %p40
      %p43 = scmp.ne.s32.totalorder %s26, %s42
      %p44 = scmp.eq.s32.totalorder %s18, 0
      %p45 = por %p43, %p44
      %s47 = sadd.s32 %s46, 1
      %p50 = scmp.eq.s32.totalorder %s12, 1
      %p51 = scmp.ne.s32.totalorder %s46, %s48
      %p52 = scmp.eq.s32.totalorder %s12, 0
      %p53 = por %p51, %p52
      %p54 = scmp.ne.s32.totalorder %s46, %s48
      %p55 = scmp.eq.s32.totalorder %s17, 1
      %p56 = por %p54, %p55
      %p57 = scmp.ne.s32.totalorder %s48, %s49
      %p58 = scmp.eq.s32.totalorder %s17, 0
      %p59 = por %p57, %p58
      %p60 = scmp.ne.s32.totalorder %s48, %s49
      %p61 = scmp.eq.s32.totalorder %s18, 1
      %p62 = por %p60, %p61
      %p64 = scmp.ne.s32.totalorder %s49, %s63
      %p65 = scmp.eq.s32.totalorder %s18, 0
      %p66 = por %p64, %p65
      %s68 = sadd.s32 %s67, 1
      %p71 = scmp.eq.s32.totalorder %s12, 1
      %p72 = scmp.ne.s32.totalorder %s67, %s69
      %p73 = scmp.eq.s32.totalorder %s12, 0
      %p74 = por %p72, %p73
      %p75 = scmp.ne.s32.totalorder %s67, %s69
      %p76 = scmp.eq.s32.totalorder %s17, 1
      %p77 = por %p75, %p76
      %p78 = scmp.ne.s32.totalorder %s69, %s70
      %p79 = scmp.eq.s32.totalorder %s17, 0
      %p80 = por %p78, %p79
      %p81 = scmp.ne.s32.totalorder %s69, %s70
      %p82 = scmp.eq.s32.totalorder %s18, 1
      %p83 = por %p81, %p82
      %p85 = scmp.ne.s32.totalorder %s70, %s84
      %p86 = scmp.eq.s32.totalorder %s18, 0
      %p87 = por %p85, %p86
      %s88 = ssub.s32 %s12, %s19
      %p89 = scmp.eq.s32.totalorder %s88, 0
      %s91 = sadd.s32 %s90, 1
      %s92 = scalar_select %p89, %s90, %s91
      %p95 = pneg %p89
      %p96 = scmp.eq.s32.totalorder %s12, 1
      %p97 = por %p95, %p96
      %p98 = scmp.ne.s32.totalorder %s90, %s93
      %p99 = scmp.eq.s32.totalorder %s12, 0
      %p100 = por %p98, %p99
      %p101 = scmp.ne.s32.totalorder %s90, %s93
      %p102 = scmp.eq.s32.totalorder %s17, 1
      %p103 = por %p101, %p102
      %p104 = scmp.ne.s32.totalorder %s93, %s94
      %p105 = scmp.eq.s32.totalorder %s17, 0
      %p106 = por %p104, %p105
      %p107 = scmp.ne.s32.totalorder %s93, %s94
      %p108 = scmp.eq.s32.totalorder %s18, 1
      %p109 = por %p107, %p108
      %p111 = scmp.ne.s32.totalorder %s94, %s110
      %p112 = scmp.eq.s32.totalorder %s18, 0
      %p113 = por %p111, %p112
      %p114 = scmp.le.s32.totalorder 1, %s12
      %p115 = scmp.lt.s32.totalorder %s12, 3
      %p116 = pnand %p114, %p115
      %p117 = pneg %p116
      // Predicated region
      $region9: #{tpu_custom_call.1} parent=5 // pred_check
        _
      $region10: #{tpu_custom_call.1} parent=5 // pred_check_branch
        %119 = sbr.rel (%p116) target = $region12
      $region11: #{tpu_custom_call.1} parent=5 // pred_region
        %s120 = ssub.s32 %s12, 1
        // Predicated region
        $region13: #{tpu_custom_call.1} parent=11 // pred_check
          %p121 = pneg %p59
        $region14: #{tpu_custom_call.1} parent=11 // pred_check_branch
          %123 = sbr.rel (%p121) target = $region16
        $region15: #{tpu_custom_call.1} parent=11 // pred_region
          _
        $region16: #{tpu_custom_call.1} parent=11 // pred_fallthru
          _
        // Predicated region
        $region17: #{tpu_custom_call.1} parent=11 // pred_check
          %p124 = pneg %p80
        $region18: #{tpu_custom_call.1} parent=11 // pred_check_branch
          %126 = sbr.rel (%p124) target = $region20
        $region19: #{tpu_custom_call.1} parent=11 // pred_region
          _
        $region20: #{tpu_custom_call.1} parent=11 // pred_fallthru
          _
      $region12: #{tpu_custom_call.1} parent=5 // pred_fallthru
        _
      %p127 = scmp.lt.s32.totalorder %s12, 2
      // Predicated region
      $region21: #{tpu_custom_call.1} parent=5 // pred_check
        %p128 = pneg %p127
      $region22: #{tpu_custom_call.1} parent=5 // pred_check_branch
        %130 = sbr.rel (%p128) target = $region24
      $region23: #{tpu_custom_call.1} parent=5 // pred_region
        // Predicated region
        $region25: #{tpu_custom_call.1} parent=23 // pred_check
          %p131 = pneg %p32
        $region26: #{tpu_custom_call.1} parent=23 // pred_check_branch
          %133 = sbr.rel (%p131) target = $region28
        $region27: #{tpu_custom_call.1} parent=23 // pred_region
          %p134 = scmp.lt.s32.totalorder %s12, 1
          %s135 = scalar_select %p134, %s12, 1
          %s136 = smul.addr %s135, 4
          %s137 = scalar_lea.vmem %s0, %s136
        $region28: #{tpu_custom_call.1} parent=23 // pred_fallthru
          _
      $region24: #{tpu_custom_call.1} parent=5 // pred_fallthru
        _
      %p138 = scmp.le.s32.totalorder 1, %s12
      %p139 = scmp.lt.s32.totalorder %s12, 3
      %p140 = pnand %p138, %p139
      %p141 = pneg %p140
      // Predicated region
      $region29: #{tpu_custom_call.1} parent=5 // pred_check
        _
      $region30: #{tpu_custom_call.1} parent=5 // pred_check_branch
        %143 = sbr.rel (%p140) target = $region32
      $region31: #{tpu_custom_call.1} parent=5 // pred_region
        %s144 = ssub.s32 %s12, 1
        %p145 = scmp.lt.s32.totalorder %s17, 1
        %s146 = scalar_select %p145, %s17, 1
        %s147 = smul.addr %s146, 4
        %s148 = scalar_lea.vmem %s0, %s147
        %p149 = pneg %p38
        %p150 = pneg %p35
        %p151 = pneg %p59
        %p152 = pneg %p56
        %p153 = pneg %p80
        %p154 = pneg %p77
        %p155 = pneg %p106
        %p156 = pneg %p103
        %s157 = sand.u32 %s93, 1
        %s158 = scalar_lea.sflag [#allocation3], %s157
        %s159 = sand.u32 %s93, 1
        %s160 = smul.addr %s159, 4
        %s161 = scalar_lea.vmem [#allocation2], %s160
        %p162 = scmp.lt.s32.totalorder %s17, 1
        %s163 = scalar_select %p162, %s17, 1
        %s164 = smul.addr %s163, 4
        %s165 = scalar_lea.vmem %s0, %s164
        %v166 = vld [vmem:[%s165] sm:$0xf]
        %vm167 = vcmask 125952
        %v168 = vsel %vm167, %v166, 0.0
        %169 = vadd.xlane.f32.xlu0 %v168
        %v170 = vpop.xlane.xlu0 %169
        %v171 = vrot.slane %v170, 4
        %v172 = vadd.f32 %v170, %v171
        %v173 = vrot.slane %v172, 2
        %v174 = vadd.f32 %v172, %v173
        %v175 = vrot.slane %v174, 1
        %v176 = vadd.f32 %v174, %v175
        %s177 = vtos %v176
        %v178 = vrcp.pop 64.0
        %s179 = vtos %v178
        %s180 = smul.f32 %s177, %s179
        %v181 = vstv %s180
        %v182 = vsub.f32 %v166, %v181
        %v183 = vmul.f32 %v182, %v182
        %v184 = vsel %vm167, %v183, 0.0
        %185 = vadd.xlane.f32.xlu0 %v184
        %v186 = vpop.xlane.xlu0 %185
        %v187 = vrot.slane %v186, 4
        %v188 = vadd.f32 %v186, %v187
        %v189 = vrot.slane %v188, 2
        %v190 = vadd.f32 %v188, %v189
        %v191 = vrot.slane %v190, 1
        %v192 = vadd.f32 %v190, %v191
        %s193 = vtos %v192
        %v194 = vrcp.pop 64.0
        %s195 = vtos %v194
        %s196 = smul.f32 %s193, %s195
        %s197 = sadd.f32 %s196, 1e-08
        %v198 = vstv %s197
        %v199 = vrsqrt.pop %v198
        %s200 = vtos %v199
        %v201 = vld [vmem:[%s1] sm:$0xf]
        %v202 = vstv %s200
        %v203 = vmul.f32 %v201, %v202
        %205 = vset.pattern.permute.xlu0 0
        %206 = vperm.xlu0 %205, %v203
        %v207 = vpop.permute.xlu0 %206
        %v209 = vmul.f32 %v182, %v207
        %v210 = vld [vmem:[%s2] sm:$0xf]
        %212 = vset.pattern.permute.xlu0 0
        %213 = vperm.xlu0 %212, %v210
        %v214 = vpop.permute.xlu0 %213
        %v216 = vadd.f32 %v209, %v214
        %217 = vst.msk [vmem:[%s161] sm:$0xf] %vm167, %v216
        %s218 = sand.u32 %s93, 1
        %s219 = scalar_lea.sflag [#allocation3], %s218
        %s220 = sand.u32 %s93, 1
        %s221 = smul.addr %s220, 4
        %s222 = scalar_lea.vmem [#allocation2], %s221
        // Predicated region
        $region33: #{tpu_custom_call.1} parent=31 // pred_check
          %p223 = pneg %p103
        $region34: #{tpu_custom_call.1} parent=31 // pred_check_branch
          %225 = sbr.rel (%p223) target = $region36
        $region35: #{tpu_custom_call.1} parent=31 // pred_region
          %s227 = ssub.s32 64, 64
          %228 = vsyncadd %s219, %s227
          %s229 = smul.addr %s17, 64
          %s230 = scalar_lea.hbm %s3, %s229
          %s232 = sshll.u32 %s222, 4
          %s233 = int_to_ptr.vmem [resolvable:$true] %s232
          %235 = dma.vmem_to_hbm [thread:$0]  %s233, 64, %s230, %s219
        $region36: #{tpu_custom_call.1} parent=31 // pred_fallthru
          _
      $region32: #{tpu_custom_call.1} parent=5 // pred_fallthru
        _
      %p236 = scmp.le.s32.totalorder 2, %s12
      // Predicated region
      $region37: #{tpu_custom_call.1} parent=5 // pred_check
        %p237 = pneg %p236
      $region38: #{tpu_custom_call.1} parent=5 // pred_check_branch
        %239 = sbr.rel (%p237) target = $region40
      $region39: #{tpu_custom_call.1} parent=5 // pred_region
        %s240 = ssub.s32 %s12, 2
        // Predicated region
        $region41: #{tpu_custom_call.1} parent=39 // pred_check
          %p241 = pneg %p109
        $region42: #{tpu_custom_call.1} parent=39 // pred_check_branch
          %243 = sbr.rel (%p241) target = $region44
        $region43: #{tpu_custom_call.1} parent=39 // pred_region
          %s244 = sand.u32 %s94, 1
          %s245 = scalar_lea.sflag [#allocation3], %s244
          %s246 = sand.u32 %s94, 1
          %s247 = smul.addr %s246, 4
          %s248 = scalar_lea.vmem [#allocation2], %s247
          %249 = dma.done %s245, 64
        $region44: #{tpu_custom_call.1} parent=39 // pred_fallthru
          _
      $region40: #{tpu_custom_call.1} parent=5 // pred_fallthru
        _
    $region6: #{tpu_custom_call.1} parent=1 // loop_footer
      %s16 = sadd.s32 1, %s12
    $region7: #{tpu_custom_call.1} parent=1 // loop_footer_branch
      %11 = sbr.rel target = $region3
    $region8: #{tpu_custom_call.1} parent=1 // loop_exit
      _
    %250 = vsyncpa [#allocation3], 1
    %s251 = scalar_lea.sflag [#allocation3], 1
    %252 = vsyncpa %s251, 1

</llo_original>
